<compile_context>
chip_gen: v7x
topology: tpu7x:2x2x1
jax: 0.10.0
libtpu: 0.0.40
codegen_flags: <defaults>
</compile_context>

<pallas_src>
import functools

import jax
import jax.numpy as jnp
from jax.experimental import pallas as pl
from jax.experimental.pallas import tpu as pltpu

_LANE = 128


def _mse_sum_kernel(recon_ref, x_ref, out_ref, acc_ref, *, total_rows):
    """Streaming sum((recon - x)^2) over (tile_rows, 128) blocks."""
    k = pl.program_id(1)

    @pl.when(k == 0)
    def _init():
        acc_ref[...] = jnp.zeros_like(acc_ref)

    tile_rows = acc_ref.shape[0]
    # Global tile index along the row axis. It may point past the end for the
    # phantom tiles of the second core-half; those rows are fully masked below
    # (the index_map clamps the DMA to the last real tile, so reads stay in bounds).
    g = pl.program_id(0) * pl.num_programs(1) + k
    rows_left = total_rows - g * tile_rows
    row_idx = jax.lax.broadcasted_iota(jnp.int32, acc_ref.shape, 0)
    valid = row_idx < rows_left

    r = recon_ref[...].astype(jnp.float32)
    t = x_ref[...].astype(jnp.float32)
    d = jnp.where(valid, r - t, 0.0)
    acc_ref[...] += d * d            # pure VPU every step; no per-step reduce

    @pl.when(k == pl.num_programs(1) - 1)
    def _flush():
        out_ref[0, 0] = jnp.sum(acc_ref[...])   # one reduce per core-half


def _kl_kernel(mu_ref, logvar_ref, out_ref):
    mu = mu_ref[...].astype(jnp.float32)
    lv = logvar_ref[...].astype(jnp.float32)
    out_ref[0, 0] = -0.5 * jnp.sum(1.0 + lv - mu * mu - jnp.exp(lv))


def _mse_sum(recon_x, x, *, max_tile_rows):
    n = x.size
    recon_flat = recon_x.reshape(-1)
    x_flat = x.reshape(-1)

    if n % _LANE != 0:
        # Rare fallback: zero-pad the flat arrays to a lane multiple (loss-neutral,
        # (0-0)^2 == 0).  The common case (numel % 128 == 0) has no pad copy at all.
        pad = _LANE - (n % _LANE)
        recon_flat = jnp.pad(recon_flat, (0, pad))
        x_flat = jnp.pad(x_flat, (0, pad))

    rows = recon_flat.size // _LANE
    recon2d = recon_flat.reshape(rows, _LANE)
    x2d = x_flat.reshape(rows, _LANE)

    max_tile_rows = max(8, (int(max_tile_rows) // 8) * 8)
    if rows <= max_tile_rows:
        tile_rows = rows          # full-array block (allowed even if not 8-aligned)
    else:
        tile_rows = max_tile_rows  # multiple of 8; last partial tile handled by mask

    n_tiles = (rows + tile_rows - 1) // tile_rows
    num_parts = 2 if n_tiles > 1 else 1       # leading "parallel" axis (v7x: 2 TCs)
    tiles_per_part = (n_tiles + num_parts - 1) // num_parts
    last_tile = n_tiles - 1

    def in_index_map(p, k):
        g = p * tiles_per_part + k
        return (jnp.minimum(g, last_tile), 0)   # clamp phantom tiles into bounds

    partials = pl.pallas_call(
        functools.partial(_mse_sum_kernel, total_rows=rows),
        out_shape=jax.ShapeDtypeStruct((num_parts, 1), jnp.float32),
        grid_spec=pltpu.PrefetchScalarGridSpec(
            num_scalar_prefetch=0,
            grid=(num_parts, tiles_per_part),
            in_specs=[
                pl.BlockSpec((tile_rows, _LANE), in_index_map),
                pl.BlockSpec((tile_rows, _LANE), in_index_map),
            ],
            out_specs=pl.BlockSpec((1, 1), lambda p, k: (p, 0),
                                   memory_space=pltpu.SMEM),
            scratch_shapes=[pltpu.VMEM((tile_rows, _LANE), jnp.float32)],
        ),
        compiler_params=pltpu.CompilerParams(
            dimension_semantics=("parallel", "arbitrary"),
            vmem_limit_bytes=32 * 1024 * 1024,
        ),
    )(recon2d, x2d)

    return jnp.sum(partials)


def _kl_sum(mu, logvar):
    mu2d = mu.reshape(mu.shape[0], -1)
    lv2d = logvar.reshape(logvar.shape[0], -1)
    kl = pl.pallas_call(
        _kl_kernel,
        out_shape=jax.ShapeDtypeStruct((1, 1), jnp.float32),
        grid_spec=pltpu.PrefetchScalarGridSpec(
            num_scalar_prefetch=0,
            grid=(1,),
            in_specs=[
                pl.BlockSpec(mu2d.shape, lambda i: (0, 0)),
                pl.BlockSpec(lv2d.shape, lambda i: (0, 0)),
            ],
            out_specs=pl.BlockSpec((1, 1), lambda i: (0, 0),
                                   memory_space=pltpu.SMEM),
        ),
    )(mu2d, lv2d)
    return kl[0, 0]


def vae_loss(recon_x, x, mu, logvar, *, max_tile_rows=4096):
    """recon_x, x: (B, C, H, W) (any trailing shape).  mu, logvar: (B, Z)."""
    recon_loss = _mse_sum(recon_x, x, max_tile_rows=max_tile_rows)
    kl_loss = _kl_sum(mu, logvar)
    return {
        "loss": recon_loss + kl_loss,
        "recon_loss": recon_loss,
        "kl_loss": kl_loss,
    }


def _reference(recon_x, x, mu, logvar):
    B = x.shape[0]
    recon = jnp.sum((recon_x.reshape(B, -1).astype(jnp.float32)
                     - x.reshape(B, -1).astype(jnp.float32)) ** 2)
    kl = -0.5 * jnp.sum(1.0 + logvar.astype(jnp.float32)
                        - mu.astype(jnp.float32) ** 2
                        - jnp.exp(logvar.astype(jnp.float32)))
    return recon, kl


if __name__ == "__main__":
    key = jax.random.PRNGKey(0)

    # --- Test 1: small shapes implied by the module (single tile path) ---
    k1, k2, k3, k4, key = jax.random.split(key, 5)
    B, C, H, W, Z = 2, 4, 16, 16, 32
    x = jax.random.uniform(k1, (B, C, H, W), dtype=jnp.float32)
    recon_x = jax.random.uniform(k2, (B, C, H, W), dtype=jnp.float32)
    mu = jax.random.normal(k3, (B, Z), dtype=jnp.float32)
    logvar = 0.1 * jax.random.normal(k4, (B, Z), dtype=jnp.float32)

    out = vae_loss(recon_x, x, mu, logvar)
    out = jax.tree_util.tree_map(jax.block_until_ready, out)
    recon_ref, kl_ref = _reference(recon_x, x, mu, logvar)
    assert jnp.allclose(out["recon_loss"], recon_ref, rtol=1e-4, atol=1e-3)
    assert jnp.allclose(out["kl_loss"], kl_ref, rtol=1e-4, atol=1e-3)
    assert jnp.allclose(out["loss"], recon_ref + kl_ref, rtol=1e-4, atol=1e-3)

    # --- Test 2: odd sizes exercising the pad-fallback, partial tile, phantom
    #     tile and the 2-way parallel split ---
    k1, k2, k3, k4, key = jax.random.split(key, 5)
    B2, C2, H2, W2, Z2 = 3, 3, 33, 31, 20
    x2 = jax.random.uniform(k1, (B2, C2, H2, W2), dtype=jnp.float32)
    recon_x2 = jax.random.uniform(k2, (B2, C2, H2, W2), dtype=jnp.float32)
    mu2 = jax.random.normal(k3, (B2, Z2), dtype=jnp.float32)
    logvar2 = 0.1 * jax.random.normal(k4, (B2, Z2), dtype=jnp.float32)

    out2 = vae_loss(recon_x2, x2, mu2, logvar2, max_tile_rows=16)
    out2 = jax.tree_util.tree_map(jax.block_until_ready, out2)
    recon_ref2, kl_ref2 = _reference(recon_x2, x2, mu2, logvar2)
    assert jnp.allclose(out2["recon_loss"], recon_ref2, rtol=1e-4, atol=1e-3)
    assert jnp.allclose(out2["kl_loss"], kl_ref2, rtol=1e-4, atol=1e-3)
    assert jnp.allclose(out2["loss"], recon_ref2 + kl_ref2, rtol=1e-4, atol=1e-3)

    print("KERNEL_OK")
</pallas_src>

<mosaic_0001>
module attributes {stable_mosaic.version = 11 : i64} {
  func.func @_mse_sum_kernel(%arg0: i32, %arg1: i32, %arg2: memref<16x128xf32, #tpu.memory_space<vmem>>, %arg3: memref<16x128xf32, #tpu.memory_space<vmem>>, %arg4: memref<1x1xf32, #tpu.memory_space<smem>>, %arg5: memref<16x128xf32, #tpu.memory_space<vmem>>) attributes {dimension_semantics = [#tpu.dimension_semantics<parallel>, #tpu.dimension_semantics<arbitrary>], iteration_bounds = array<i64: 1, 1>, scalar_prefetch = 0 : i64, scratch_operands = 1 : i64, tpu.core_type = #tpu.core_type<tc>, window_params = [{transform_indices = @transform_0, window_bounds = array<i64: 16, 128>}, {transform_indices = @transform_1, window_bounds = array<i64: 16, 128>}, {transform_indices = @transform_2, window_bounds = array<i64: 1, 1>}]} {
    %c0_i32 = arith.constant 0 : i32
    %0 = arith.cmpi eq, %arg1, %c0_i32 : i32
    %1 = arith.extui %0 : i1 to i32
    %c0_i32_0 = arith.constant 0 : i32
    %2 = arith.cmpi ne, %1, %c0_i32_0 : i32
    scf.if %2 {
      %cst_11 = arith.constant 0.000000e+00 : f32
      %22 = vector.broadcast %cst_11 : f32 to vector<16x128xf32>
      %c0_12 = arith.constant 0 : index
      %c0_13 = arith.constant 0 : index
      %23 = vector.load %arg5[%c0_12, %c0_13] : memref<16x128xf32, #tpu.memory_space<vmem>>, vector<16x128xf32>
      tpu.vector_store %arg5[%c0_12, %c0_13], %22 {strides = array<i32>} : memref<16x128xf32, #tpu.memory_space<vmem>>, vector<16x128xf32>,
    } else {
    }
    %c1_i32 = arith.constant 1 : i32
    %3 = arith.muli %arg0, %c1_i32 : i32
    %4 = arith.addi %3, %arg1 : i32
    %c16_i32 = arith.constant 16 : i32
    %5 = arith.muli %4, %c16_i32 : i32
    %c16_i32_1 = arith.constant 16 : i32
    %6 = arith.subi %c16_i32_1, %5 : i32
    %7 = tpu.iota {dimensions = array<i32: 0>} : vector<16x128xi32>
    %8 = vector.broadcast %6 : i32 to vector<16x128xi32>
    %9 = arith.cmpi slt, %7, %8 : vector<16x128xi32>
    %c0 = arith.constant 0 : index
    %c0_2 = arith.constant 0 : index
    %10 = vector.load %arg2[%c0, %c0_2] : memref<16x128xf32, #tpu.memory_space<vmem>>, vector<16x128xf32>
    %c0_3 = arith.constant 0 : index
    %c0_4 = arith.constant 0 : index
    %11 = vector.load %arg3[%c0_3, %c0_4] : memref<16x128xf32, #tpu.memory_space<vmem>>, vector<16x128xf32>
    %12 = arith.subf %10, %11 : vector<16x128xf32>
    %cst = arith.constant 0.000000e+00 : f32
    %13 = vector.broadcast %cst : f32 to vector<16x128xf32>
    %14 = arith.select %9, %12, %13 : vector<16x128xi1>, vector<16x128xf32>
    %c0_5 = arith.constant 0 : index
    %c0_6 = arith.constant 0 : index
    %15 = vector.load %arg5[%c0_5, %c0_6] : memref<16x128xf32, #tpu.memory_space<vmem>>, vector<16x128xf32>
    %16 = arith.mulf %14, %14 : vector<16x128xf32>
    %17 = arith.addf %15, %16 : vector<16x128xf32>
    %c0_7 = arith.constant 0 : index
    %c0_8 = arith.constant 0 : index
    %18 = vector.load %arg5[%c0_7, %c0_8] : memref<16x128xf32, #tpu.memory_space<vmem>>, vector<16x128xf32>
    tpu.vector_store %arg5[%c0_7, %c0_8], %17 {strides = array<i32>} : memref<16x128xf32, #tpu.memory_space<vmem>>, vector<16x128xf32>,
    %c0_i32_9 = arith.constant 0 : i32
    %19 = arith.cmpi eq, %arg1, %c0_i32_9 : i32
    %20 = arith.extui %19 : i1 to i32
    %c0_i32_10 = arith.constant 0 : i32
    %21 = arith.cmpi ne, %20, %c0_i32_10 : i32
    scf.if %21 {
      %c0_11 = arith.constant 0 : index
      %c0_12 = arith.constant 0 : index
      %22 = vector.load %arg5[%c0_11, %c0_12] : memref<16x128xf32, #tpu.memory_space<vmem>>, vector<16x128xf32>
      %23 = vector.shape_cast %22 : vector<16x128xf32> to vector<1x16x128xf32>
      %cst_13 = arith.constant dense<0.000000e+00> : vector<1xf32>
      %24 = vector.multi_reduction <add>, %23, %cst_13 [1, 2] : vector<1x16x128xf32> to vector<1xf32>
      %25 = vector.shape_cast %24 : vector<1xf32> to vector<1x1x1xf32>
      %26 = vector.extract %25[0, 0, 0] : f32 from vector<1x1x1xf32>
      %c0_14 = arith.constant 0 : index
      %c0_15 = arith.constant 0 : index
      %27 = memref.load %arg4[%c0_14, %c0_15] : memref<1x1xf32, #tpu.memory_space<smem>>
      memref.store %26, %arg4[%c0_14, %c0_15] : memref<1x1xf32, #tpu.memory_space<smem>>
    } else {
    }
    return
  }
  func.func @transform_0(%arg0: i32, %arg1: i32) -> (i32, i32) {
    %c1_i32 = arith.constant 1 : i32
    %0 = arith.muli %arg0, %c1_i32 : i32
    %1 = arith.addi %0, %arg1 : i32
    %c0_i32 = arith.constant 0 : i32
    %2 = arith.minsi %1, %c0_i32 : i32
    %c0_i32_0 = arith.constant 0 : i32
    %c0_i32_1 = arith.constant 0 : i32
    return %2, %c0_i32_0 : i32, i32
  }
  func.func @transform_1(%arg0: i32, %arg1: i32) -> (i32, i32) {
    %c1_i32 = arith.constant 1 : i32
    %0 = arith.muli %arg0, %c1_i32 : i32
    %1 = arith.addi %0, %arg1 : i32
    %c0_i32 = arith.constant 0 : i32
    %2 = arith.minsi %1, %c0_i32 : i32
    %c0_i32_0 = arith.constant 0 : i32
    %c0_i32_1 = arith.constant 0 : i32
    return %2, %c0_i32_0 : i32, i32
  }
  func.func @transform_2(%arg0: i32, %arg1: i32) -> (i32, i32) {
    %c0_i32 = arith.constant 0 : i32
    %c0_i32_0 = arith.constant 0 : i32
    return %arg0, %c0_i32 : i32, i32
  }
}

</mosaic_0001>

<llo_original>
// kernel: tpu_custom_call.1
$region0: #{tpu_custom_call.1}
  #allocation0 [shape = 'u32[]', space=smem, size = 0x4, offset = 0x4, fixed_abs, tag = 'smem constant byte address 0x4 - core index']
  #allocation1 [shape = 'u32[144,128]{1,0:T(1,128)}', space=vmem, size = 0x12000, scoped, tag = 'internal scratch']
  #allocation2 [shape = 'f32[16,128]{1,0:T(8,128)}', space=vmem, size = 0x2000, scoped, tag = 'scratch operand']
  %s0 = inlined_call_operand.hbm [shape: f32[16,128], index: 0, kind: input, shape index: {}]
  %s1 = inlined_call_operand.hbm [shape: f32[16,128], index: 1, kind: input, shape index: {}]
  %s2 = inlined_call_operand.hbm [shape: f32[1,1], index: 2, kind: output, shape index: {}]
  %s3 = sld [smem:[#allocation0]]
  $region34: #{tpu_custom_call.1} parent=0
    _
  %s5 = ssub.s32 1, %s3
  %s6 = scalar_select 0, %s5, %s3
  $region1: #{tpu_custom_call.1} parent=0
    #allocation3 [shape = 'u8[8192]{0}', space=vmem, size = 0x2000, scoped, tag = 'input window, operand 0, single buffered']
    #allocation4 [shape = 's32[1]{0}', space=sflag, size = 0x4, scoped, tag = 'scoped memory for tpu_custom_call.1']
    #allocation5 [shape = 's32[1]{0}', space=sflag, size = 0x4, scoped, tag = 'scoped memory for tpu_custom_call.1']
    #allocation6 [shape = 'u8[8192]{0}', space=vmem, size = 0x2000, scoped, tag = 'input window, operand 1, single buffered']
    #allocation7 [shape = 's32[1]{0}', space=sflag, size = 0x4, scoped, tag = 'scoped memory for tpu_custom_call.1']
    #allocation8 [shape = 'u8[512]{0}', space=smem, size = 0x200, scoped, tag = 'output window, operand 0, single buffered']
    %7 = vsyncpa [#allocation4], 0
    %8 = vsyncpa [#allocation7], 0
    %9 = vsyncpa [#allocation5], 0
    // Predicated region
    $region2: #{tpu_custom_call.1} parent=1 // pred_check
      _
    $region3: #{tpu_custom_call.1} parent=1 // pred_check_branch
      %11 = sbr.rel (0) target = $region5
    $region4: #{tpu_custom_call.1} parent=1 // pred_region
      %s12 = sadd.s32 0, 0
      %p13 = scmp.lt.s32.totalorder %s12, 0
      %s14 = scalar_select %p13, %s12, 0
      %s15 = smul.u32 2, %s14
      %s17 = ssub.s32 256, 256
      %18 = vsyncadd [#allocation4], %s17
      %s19 = smul.addr %s15, 128
      %s20 = scalar_lea.hbm %s0, %s19
      %s21 = sshll.u32 [#allocation3], 4
      %s22 = int_to_ptr.vmem [resolvable:$true] %s21
      %27 = dma.hbm_to_vmem [thread:$0]  %s20, 256, %s22, [#allocation4], 128, 128, 8
    $region5: #{tpu_custom_call.1} parent=1 // pred_fallthru
      _
    // Predicated region
    $region6: #{tpu_custom_call.1} parent=1 // pred_check
      _
    $region7: #{tpu_custom_call.1} parent=1 // pred_check_branch
      %29 = sbr.rel (0) target = $region9
    $region8: #{tpu_custom_call.1} parent=1 // pred_region
      %s30 = sadd.s32 0, 0
      %p31 = scmp.lt.s32.totalorder %s30, 0
      %s32 = scalar_select %p31, %s30, 0
      %s33 = smul.u32 2, %s32
      %s35 = ssub.s32 256, 256
      %36 = vsyncadd [#allocation7], %s35
      %s37 = smul.addr %s33, 128
      %s38 = scalar_lea.hbm %s1, %s37
      %s39 = sshll.u32 [#allocation6], 4
      %s40 = int_to_ptr.vmem [resolvable:$true] %s39
      %45 = dma.hbm_to_vmem [thread:$0]  %s38, 256, %s40, [#allocation7], 128, 128, 8
    $region9: #{tpu_custom_call.1} parent=1 // pred_fallthru
      _
    // Predicated region
    $region10: #{tpu_custom_call.1} parent=1 // pred_check
      _
    $region11: #{tpu_custom_call.1} parent=1 // pred_check_branch
      %47 = sbr.rel (0) target = $region13
    $region12: #{tpu_custom_call.1} parent=1 // pred_region
      %48 = dma.done [#allocation4], 256
    $region13: #{tpu_custom_call.1} parent=1 // pred_fallthru
      _
    // Predicated region
    $region14: #{tpu_custom_call.1} parent=1 // pred_check
      _
    $region15: #{tpu_custom_call.1} parent=1 // pred_check_branch
      %50 = sbr.rel (0) target = $region17
    $region16: #{tpu_custom_call.1} parent=1 // pred_region
      %51 = dma.done [#allocation7], 256
    $region17: #{tpu_custom_call.1} parent=1 // pred_fallthru
      _
    %s52 = sadd.s32 0, 0
    %p53 = scmp.lt.s32.totalorder %s52, 0
    %s54 = scalar_select %p53, %s52, 0
    %s55 = smul.u32 2, %s54
    %s56 = sadd.s32 0, 0
    %p57 = scmp.lt.s32.totalorder %s56, 0
    %s58 = scalar_select %p57, %s56, 0
    %s59 = smul.u32 2, %s58
    %p60 = scmp.eq.s32.totalorder 0, 0
    // Predicated region
    $region18: #{tpu_custom_call.1} parent=1 // pred_check
      %p61 = pneg %p60
    $region19: #{tpu_custom_call.1} parent=1 // pred_check_branch
      %63 = sbr.rel (%p61) target = $region21
    $region20: #{tpu_custom_call.1} parent=1 // pred_region
      %64 = vst [vmem:[#allocation2] sm:$0xff] 0.0
      %65 = vst [vmem:[#allocation2 + $0x8] sm:$0xff] 0.0
    $region21: #{tpu_custom_call.1} parent=1 // pred_fallthru
      _
    %s66 = sadd.s32 0, 0
    %s67 = smul.u32 %s66, 16
    %s68 = ssub.s32 16, %s67
    %v69 = vlaneseq
    %v70 = vshrl.u32 %v69, 7
    %v71 = vadd.s32 %v70, 8
    %v72 = vstv %s68
    %vm73 = vcmp.lt.s32.totalorder %v70, %v72
    %vm74 = vcmp.lt.s32.totalorder %v71, %v72
    %v75 = vld [vmem:[#allocation3] sm:$0xff]
    %v76 = vld [vmem:[#allocation3 + $0x8] sm:$0xff]
    %v77 = vld [vmem:[#allocation6] sm:$0xff]
    %v78 = vld [vmem:[#allocation6 + $0x8] sm:$0xff]
    %v79 = vsub.f32 %v75, %v77
    %v80 = vsub.f32 %v76, %v78
    %v81 = vsel %vm73, %v79, 0.0
    %v82 = vsel %vm74, %v80, 0.0
    %v83 = vld [vmem:[#allocation2] sm:$0xff]
    %v84 = vld [vmem:[#allocation2 + $0x8] sm:$0xff]
    %v85 = vmul.f32 %v81, %v81
    %v86 = vmul.f32 %v82, %v82
    %v87 = vadd.f32 %v83, %v85
    %v88 = vadd.f32 %v84, %v86
    %89 = vst [vmem:[#allocation2] sm:$0xff] %v87
    %90 = vst [vmem:[#allocation2 + $0x8] sm:$0xff] %v88
    // Predicated region
    $region22: #{tpu_custom_call.1} parent=1 // pred_check
      %p91 = pneg %p60
    $region23: #{tpu_custom_call.1} parent=1 // pred_check_branch
      %93 = sbr.rel (%p91) target = $region25
    $region24: #{tpu_custom_call.1} parent=1 // pred_region
      %v94 = vld [vmem:[#allocation2] sm:$0xff]
      %v95 = vld [vmem:[#allocation2 + $0x8] sm:$0xff]
      %v96 = vadd.f32 %v94, %v95
      %97 = vadd.xlane.f32.xlu0 %v96
      %v98 = vpop.xlane.xlu0 %97
      %v99 = vrot.slane %v98, 4
      %v100 = vadd.f32 %v98, %v99
      %v101 = vrot.slane %v100, 2
      %v102 = vadd.f32 %v100, %v101
      %v103 = vrot.slane %v102, 1
      %v104 = vadd.f32 %v102, %v103
      %s105 = vtos %v104
      %s106 = scalar_lea.smem [#allocation8], 0
      %107 = sst [smem:[%s106]] %s105
    $region25: #{tpu_custom_call.1} parent=1 // pred_fallthru
      _
    // Predicated region
    $region26: #{tpu_custom_call.1} parent=1 // pred_check
      _
    $region27: #{tpu_custom_call.1} parent=1 // pred_check_branch
      %109 = sbr.rel (0) target = $region29
    $region28: #{tpu_custom_call.1} parent=1 // pred_region
      %s111 = ssub.s32 16, 16
      %112 = vsyncadd [#allocation5], %s111
      %115 = dma.smem_to_hbm [#allocation8], 16, %s2, [#allocation5]
    $region29: #{tpu_custom_call.1} parent=1 // pred_fallthru
      _
    // Predicated region
    $region30: #{tpu_custom_call.1} parent=1 // pred_check
      _
    $region31: #{tpu_custom_call.1} parent=1 // pred_check_branch
      %117 = sbr.rel (0) target = $region33
    $region32: #{tpu_custom_call.1} parent=1 // pred_region
      %118 = dma.done [#allocation5], 16
    $region33: #{tpu_custom_call.1} parent=1 // pred_fallthru
      _
    %119 = sfence
    %120 = vsyncpa [#allocation4], 1
    %121 = vsyncpa [#allocation7], 1
    %122 = vsyncpa [#allocation5], 1

</llo_original>
